<compile_context>
chip_gen: v7x
topology: tpu7x:2x2x1
jax: 0.10.0
libtpu: 0.0.40
codegen_flags: <defaults>
</compile_context>

<pallas_src>
import functools

import jax
import jax.numpy as jnp
from jax.experimental import pallas as pl
from jax.experimental.pallas import tpu as pltpu

BN_EPS = 1e-5


def _resblock_kernel(x_ref, w_ref, gb_ref, mask_ref, out_ref, *, wp, n_valid):
    """x: (C8, Ppad) padded-flat input, w: (C8, 9*C8), gb: (2*C8, 1),
    mask: (1, Ppad) with 1.0 at real pixel positions, out: (C8, Ppad)."""
    c8, ppad = x_ref.shape
    x = x_ref[...]
    w = w_ref[...]
    gamma = gb_ref[0:c8, :]          # (C8, 1)
    beta = gb_ref[c8:2 * c8, :]      # (C8, 1)
    mask = mask_ref[...]             # (1, Ppad)
    inv_m = 1.0 / n_valid

    # Flat-index offsets of the 9 taps of a padding=1 3x3 conv.
    offs = [(dy - 1) * wp + (dx - 1) for dy in range(3) for dx in range(3)]

    def conv_bn_relu(z):
        # z: (C8, Ppad), exactly zero at every padded position (border + tail).
        # Build the 9 shifted views with static lane rotations (XLU) and stack
        # them on the sublane axis -> a single K = 9*C8 MXU matmul.
        taps = [z if o == 0 else pltpu.roll(z, (-o) % ppad, axis=1) for o in offs]
        patches = jnp.concatenate(taps, axis=0)                        # (9*C8, Ppad)
        acc = jnp.dot(w, patches, preferred_element_type=jnp.float32)  # (C8, Ppad)

        # BatchNorm2d (training): per-channel stats over real positions only,
        # one pass over the accumulator (sum & sum of squares).
        am = acc * mask
        s1 = jnp.sum(am, axis=1, keepdims=True)            # (C8, 1)
        s2 = jnp.sum(am * am, axis=1, keepdims=True)       # (C8, 1)
        mean = s1 * inv_m
        var = jnp.maximum(s2 * inv_m - mean * mean, 0.0)   # biased variance
        # Fold BN into a single per-channel scale + shift (fewer VPU passes).
        scale = jax.lax.rsqrt(var + BN_EPS) * gamma        # (C8, 1)
        shift = beta - mean * scale                        # (C8, 1)
        return jnp.maximum(acc * scale + shift, 0.0)       # ReLU

    # Stage 1; re-zero padded positions so h1 is a valid zero-padded input for
    # stage 2 in the same flat layout (this is what makes the fusion work).
    h1 = conv_bn_relu(x) * mask
    # Stage 2 + residual add (x already holds the residual in this layout).
    out_ref[...] = conv_bn_relu(h1) + x


def _round_up(v, m):
    return (v + m - 1) // m * m


@jax.jit
def resblock_forward(x_nchw, w_oihw, gamma_c, beta_c):
    """Pallas implementation of ResBlock.forward (input/output NCHW)."""
    n, c, h, w = x_nchw.shape
    c_out = w_oihw.shape[0]
    assert c_out == c, "residual add requires in_channels == out_channels"
    c8 = _round_up(max(c, c_out), 8)          # sublane-align channels
    hp, wp = h + 2, w + 2
    p = n * hp * wp
    ppad = _round_up(p, 128)                  # lane-align flattened spatial dim

    # Input: NCHW -> (C8, N, H+2, W+2) zero-padded -> (C8, Ppad) flat.
    xc = jnp.transpose(x_nchw, (1, 0, 2, 3)).astype(jnp.float32)
    xpad = jnp.pad(xc, ((0, c8 - c), (0, 0), (1, 1), (1, 1)))
    x_flat = jnp.pad(xpad.reshape(c8, p), ((0, 0), (0, ppad - p)))

    # 1.0 at real pixel positions, 0.0 at padding (spatial border + lane tail).
    ones = jnp.ones((1, n, h, w), jnp.float32)
    mask = jnp.pad(jnp.pad(ones, ((0, 0), (0, 0), (1, 1), (1, 1))).reshape(1, p),
                   ((0, 0), (0, ppad - p)))

    # Weights: OIHW -> (C8, 3, 3, C8) -> (C8, 9*C8); tap-major / cin-minor to
    # match the in-kernel patch stacking order.
    wt = jnp.transpose(w_oihw, (0, 2, 3, 1)).astype(jnp.float32)
    wt = jnp.pad(wt, ((0, c8 - c_out), (0, 0), (0, 0), (0, c8 - c)))
    w_mat = wt.reshape(c8, 9 * c8)

    # gamma / beta merged into one (2*C8, 1) input (sublane-aligned halves).
    g = jnp.pad(gamma_c.astype(jnp.float32), (0, c8 - c_out), constant_values=1.0)
    b = jnp.pad(beta_c.astype(jnp.float32), (0, c8 - c_out))
    gb = jnp.concatenate([g, b]).reshape(2 * c8, 1)

    kernel = functools.partial(_resblock_kernel, wp=wp, n_valid=float(n * h * w))
    vmem = functools.partial(pl.BlockSpec, memory_space=pltpu.MemorySpace.VMEM)
    out_flat = pl.pallas_call(
        kernel,
        out_shape=jax.ShapeDtypeStruct((c8, ppad), jnp.float32),
        in_specs=[vmem(), vmem(), vmem(), vmem()],
        out_specs=vmem(),
    )(x_flat, w_mat, gb, mask)

    # (C8, Ppad) -> NCHW, dropping channel / spatial / lane padding.
    out = out_flat[:c, :p].reshape(c, n, hp, wp)[:, :, 1:h + 1, 1:w + 1]
    return jnp.transpose(out, (1, 0, 2, 3))


def _reference_forward(x_nchw, w_oihw, gamma_c, beta_c):
    """Pure-JAX/XLA reference for validation."""
    def conv_bn_relu(x):
        y = jax.lax.conv_general_dilated(
            x, w_oihw, window_strides=(1, 1), padding="SAME",
            dimension_numbers=("NCHW", "OIHW", "NCHW"))
        mean = jnp.mean(y, axis=(0, 2, 3), keepdims=True)
        var = jnp.mean((y - mean) ** 2, axis=(0, 2, 3), keepdims=True)
        y = (y - mean) * jax.lax.rsqrt(var + BN_EPS)
        y = y * gamma_c.reshape(1, -1, 1, 1) + beta_c.reshape(1, -1, 1, 1)
        return jnp.maximum(y, 0.0)

    return conv_bn_relu(conv_bn_relu(x_nchw)) + x_nchw


if __name__ == "__main__":
    # ResBlock(in_channels=4, out_channels=4); residual add requires in == out.
    N, C, H, W = 2, 4, 16, 16

    key = jax.random.PRNGKey(0)
    kx, kw = jax.random.split(key)
    x = jax.random.normal(kx, (N, C, H, W), dtype=jnp.float32)

    # Conv2d(C, C, 3, 3, bias=False) weight, deterministic init (fan-in scaled).
    w_oihw = jax.random.normal(kw, (C, C, 3, 3), dtype=jnp.float32) * (
        1.0 / jnp.sqrt(C * 9.0))
    # BatchNorm2d(C) affine params at their PyTorch init values.
    gamma = jnp.ones((C,), jnp.float32)
    beta = jnp.zeros((C,), jnp.float32)

    out = resblock_forward(x, w_oihw, gamma, beta)
    jax.block_until_ready(out)

    ref = _reference_forward(x, w_oihw, gamma, beta)
    assert out.shape == (N, C, H, W)
    assert jnp.allclose(out, ref, atol=1e-3, rtol=1e-3), "mismatch vs reference"

    print("KERNEL_OK")
</pallas_src>

<mosaic_0001>
module attributes {stable_mosaic.version = 11 : i64} {
  func.func @_resblock_kernel(%arg0: memref<8x768xf32, #tpu.memory_space<vmem>>, %arg1: memref<8x72xf32, #tpu.memory_space<vmem>>, %arg2: memref<16x1xf32, #tpu.memory_space<vmem>>, %arg3: memref<1x768xf32, #tpu.memory_space<vmem>>, %arg4: memref<8x768xf32, #tpu.memory_space<vmem>>) attributes {dimension_semantics = [], scalar_prefetch = 0 : i64, scratch_operands = 0 : i64, tpu.core_type = #tpu.core_type<tc>} {
    %c0 = arith.constant 0 : index
    %c0_0 = arith.constant 0 : index
    %0 = vector.load %arg0[%c0, %c0_0] : memref<8x768xf32, #tpu.memory_space<vmem>>, vector<8x768xf32>
    %c0_1 = arith.constant 0 : index
    %c0_2 = arith.constant 0 : index
    %1 = vector.load %arg1[%c0_1, %c0_2] : memref<8x72xf32, #tpu.memory_space<vmem>>, vector<8x72xf32>
    %c0_3 = arith.constant 0 : index
    %c0_4 = arith.constant 0 : index
    %2 = vector.load %arg2[%c0_3, %c0_4] : memref<16x1xf32, #tpu.memory_space<vmem>>, vector<8x1xf32>
    %c8 = arith.constant 8 : index
    %c0_5 = arith.constant 0 : index
    %3 = vector.load %arg2[%c8, %c0_5] : memref<16x1xf32, #tpu.memory_space<vmem>>, vector<8x1xf32>
    %c0_6 = arith.constant 0 : index
    %c0_7 = arith.constant 0 : index
    %4 = vector.load %arg3[%c0_6, %c0_7] : memref<1x768xf32, #tpu.memory_space<vmem>>, vector<1x768xf32>
    %c19_i32 = arith.constant 19 : i32
    %5 = tpu.dynamic_rotate %0 by %c19_i32 dim 1 : vector<8x768xf32>, i32 -> vector<8x768xf32>
    %c18_i32 = arith.constant 18 : i32
    %6 = tpu.dynamic_rotate %0 by %c18_i32 dim 1 : vector<8x768xf32>, i32 -> vector<8x768xf32>
    %c17_i32 = arith.constant 17 : i32
    %7 = tpu.dynamic_rotate %0 by %c17_i32 dim 1 : vector<8x768xf32>, i32 -> vector<8x768xf32>
    %c1_i32 = arith.constant 1 : i32
    %8 = tpu.dynamic_rotate %0 by %c1_i32 dim 1 : vector<8x768xf32>, i32 -> vector<8x768xf32>
    %c767_i32 = arith.constant 767 : i32
    %9 = tpu.dynamic_rotate %0 by %c767_i32 dim 1 : vector<8x768xf32>, i32 -> vector<8x768xf32>
    %c751_i32 = arith.constant 751 : i32
    %10 = tpu.dynamic_rotate %0 by %c751_i32 dim 1 : vector<8x768xf32>, i32 -> vector<8x768xf32>
    %c750_i32 = arith.constant 750 : i32
    %11 = tpu.dynamic_rotate %0 by %c750_i32 dim 1 : vector<8x768xf32>, i32 -> vector<8x768xf32>
    %c749_i32 = arith.constant 749 : i32
    %12 = tpu.dynamic_rotate %0 by %c749_i32 dim 1 : vector<8x768xf32>, i32 -> vector<8x768xf32>
    %13 = tpu.concatenate %5, %6, %7, %8, %0, %9, %10, %11, %12 in 0 : vector<8x768xf32>, vector<8x768xf32>, vector<8x768xf32>, vector<8x768xf32>, vector<8x768xf32>, vector<8x768xf32>, vector<8x768xf32>, vector<8x768xf32>, vector<8x768xf32> -> vector<72x768xf32>
    %cst = arith.constant dense<0.000000e+00> : vector<8x768xf32>
    %14 = tpu.matmul %1, %13, %cst {dimension_numbers = #tpu.dot_dimension_numbers<[1], [0], [0], [1], [0, 0, 1, 1], [], []>} : vector<8x72xf32>, vector<72x768xf32>, vector<8x768xf32> -> vector<8x768xf32>
    %15 = vector.broadcast %4 : vector<1x768xf32> to vector<8x768xf32>
    %16 = arith.mulf %14, %15 : vector<8x768xf32>
    %cst_8 = arith.constant dense<0.000000e+00> : vector<8xf32>
    %17 = vector.multi_reduction <add>, %16, %cst_8 [1] : vector<8x768xf32> to vector<8xf32>
    %18 = vector.shape_cast %17 : vector<8xf32> to vector<8x1xf32>
    %19 = arith.mulf %16, %16 : vector<8x768xf32>
    %cst_9 = arith.constant dense<0.000000e+00> : vector<8xf32>
    %20 = vector.multi_reduction <add>, %19, %cst_9 [1] : vector<8x768xf32> to vector<8xf32>
    %21 = vector.shape_cast %20 : vector<8xf32> to vector<8x1xf32>
    %cst_10 = arith.constant 0.001953125 : f32
    %22 = vector.broadcast %cst_10 : f32 to vector<8x1xf32>
    %23 = arith.mulf %18, %22 : vector<8x1xf32>
    %cst_11 = arith.constant 0.001953125 : f32
    %24 = vector.broadcast %cst_11 : f32 to vector<8x1xf32>
    %25 = arith.mulf %21, %24 : vector<8x1xf32>
    %26 = arith.mulf %23, %23 : vector<8x1xf32>
    %27 = arith.subf %25, %26 : vector<8x1xf32>
    %cst_12 = arith.constant 0.000000e+00 : f32
    %28 = vector.broadcast %cst_12 : f32 to vector<8x1xf32>
    %29 = arith.maximumf %27, %28 : vector<8x1xf32>
    %cst_13 = arith.constant 9.99999974E-6 : f32
    %30 = vector.broadcast %cst_13 : f32 to vector<8x1xf32>
    %31 = arith.addf %29, %30 : vector<8x1xf32>
    %32 = math.rsqrt %31 : vector<8x1xf32>
    %33 = arith.mulf %32, %2 : vector<8x1xf32>
    %34 = arith.mulf %23, %33 : vector<8x1xf32>
    %35 = arith.subf %3, %34 : vector<8x1xf32>
    %36 = vector.broadcast %33 : vector<8x1xf32> to vector<8x768xf32>
    %37 = arith.mulf %14, %36 : vector<8x768xf32>
    %38 = vector.broadcast %35 : vector<8x1xf32> to vector<8x768xf32>
    %39 = arith.addf %37, %38 : vector<8x768xf32>
    %cst_14 = arith.constant 0.000000e+00 : f32
    %40 = vector.broadcast %cst_14 : f32 to vector<8x768xf32>
    %41 = arith.maximumf %39, %40 : vector<8x768xf32>
    %42 = vector.broadcast %4 : vector<1x768xf32> to vector<8x768xf32>
    %43 = arith.mulf %41, %42 : vector<8x768xf32>
    %c19_i32_15 = arith.constant 19 : i32
    %44 = tpu.dynamic_rotate %43 by %c19_i32_15 dim 1 : vector<8x768xf32>, i32 -> vector<8x768xf32>
    %c18_i32_16 = arith.constant 18 : i32
    %45 = tpu.dynamic_rotate %43 by %c18_i32_16 dim 1 : vector<8x768xf32>, i32 -> vector<8x768xf32>
    %c17_i32_17 = arith.constant 17 : i32
    %46 = tpu.dynamic_rotate %43 by %c17_i32_17 dim 1 : vector<8x768xf32>, i32 -> vector<8x768xf32>
    %c1_i32_18 = arith.constant 1 : i32
    %47 = tpu.dynamic_rotate %43 by %c1_i32_18 dim 1 : vector<8x768xf32>, i32 -> vector<8x768xf32>
    %c767_i32_19 = arith.constant 767 : i32
    %48 = tpu.dynamic_rotate %43 by %c767_i32_19 dim 1 : vector<8x768xf32>, i32 -> vector<8x768xf32>
    %c751_i32_20 = arith.constant 751 : i32
    %49 = tpu.dynamic_rotate %43 by %c751_i32_20 dim 1 : vector<8x768xf32>, i32 -> vector<8x768xf32>
    %c750_i32_21 = arith.constant 750 : i32
    %50 = tpu.dynamic_rotate %43 by %c750_i32_21 dim 1 : vector<8x768xf32>, i32 -> vector<8x768xf32>
    %c749_i32_22 = arith.constant 749 : i32
    %51 = tpu.dynamic_rotate %43 by %c749_i32_22 dim 1 : vector<8x768xf32>, i32 -> vector<8x768xf32>
    %52 = tpu.concatenate %44, %45, %46, %47, %43, %48, %49, %50, %51 in 0 : vector<8x768xf32>, vector<8x768xf32>, vector<8x768xf32>, vector<8x768xf32>, vector<8x768xf32>, vector<8x768xf32>, vector<8x768xf32>, vector<8x768xf32>, vector<8x768xf32> -> vector<72x768xf32>
    %cst_23 = arith.constant dense<0.000000e+00> : vector<8x768xf32>
    %53 = tpu.matmul %1, %52, %cst_23 {dimension_numbers = #tpu.dot_dimension_numbers<[1], [0], [0], [1], [0, 0, 1, 1], [], []>} : vector<8x72xf32>, vector<72x768xf32>, vector<8x768xf32> -> vector<8x768xf32>
    %54 = vector.broadcast %4 : vector<1x768xf32> to vector<8x768xf32>
    %55 = arith.mulf %53, %54 : vector<8x768xf32>
    %cst_24 = arith.constant dense<0.000000e+00> : vector<8xf32>
    %56 = vector.multi_reduction <add>, %55, %cst_24 [1] : vector<8x768xf32> to vector<8xf32>
    %57 = vector.shape_cast %56 : vector<8xf32> to vector<8x1xf32>
    %58 = arith.mulf %55, %55 : vector<8x768xf32>
    %cst_25 = arith.constant dense<0.000000e+00> : vector<8xf32>
    %59 = vector.multi_reduction <add>, %58, %cst_25 [1] : vector<8x768xf32> to vector<8xf32>
    %60 = vector.shape_cast %59 : vector<8xf32> to vector<8x1xf32>
    %cst_26 = arith.constant 0.001953125 : f32
    %61 = vector.broadcast %cst_26 : f32 to vector<8x1xf32>
    %62 = arith.mulf %57, %61 : vector<8x1xf32>
    %cst_27 = arith.constant 0.001953125 : f32
    %63 = vector.broadcast %cst_27 : f32 to vector<8x1xf32>
    %64 = arith.mulf %60, %63 : vector<8x1xf32>
    %65 = arith.mulf %62, %62 : vector<8x1xf32>
    %66 = arith.subf %64, %65 : vector<8x1xf32>
    %cst_28 = arith.constant 0.000000e+00 : f32
    %67 = vector.broadcast %cst_28 : f32 to vector<8x1xf32>
    %68 = arith.maximumf %66, %67 : vector<8x1xf32>
    %cst_29 = arith.constant 9.99999974E-6 : f32
    %69 = vector.broadcast %cst_29 : f32 to vector<8x1xf32>
    %70 = arith.addf %68, %69 : vector<8x1xf32>
    %71 = math.rsqrt %70 : vector<8x1xf32>
    %72 = arith.mulf %71, %2 : vector<8x1xf32>
    %73 = arith.mulf %62, %72 : vector<8x1xf32>
    %74 = arith.subf %3, %73 : vector<8x1xf32>
    %75 = vector.broadcast %72 : vector<8x1xf32> to vector<8x768xf32>
    %76 = arith.mulf %53, %75 : vector<8x768xf32>
    %77 = vector.broadcast %74 : vector<8x1xf32> to vector<8x768xf32>
    %78 = arith.addf %76, %77 : vector<8x768xf32>
    %cst_30 = arith.constant 0.000000e+00 : f32
    %79 = vector.broadcast %cst_30 : f32 to vector<8x768xf32>
    %80 = arith.maximumf %78, %79 : vector<8x768xf32>
    %81 = arith.addf %80, %0 : vector<8x768xf32>
    %c0_31 = arith.constant 0 : index
    %c0_32 = arith.constant 0 : index
    %82 = vector.load %arg4[%c0_31, %c0_32] : memref<8x768xf32, #tpu.memory_space<vmem>>, vector<8x768xf32>
    tpu.vector_store %arg4[%c0_31, %c0_32], %81 {strides = array<i32>} : memref<8x768xf32, #tpu.memory_space<vmem>>, vector<8x768xf32>,
    return
  }
}

</mosaic_0001>

<llo_original>
// kernel: resblock_forward.1
$region0: #{resblock_forward.1}
  #allocation0 [shape = 'u32[]', space=smem, size = 0x4, offset = 0x4, fixed_abs, tag = 'smem constant byte address 0x4 - core index']
  #allocation1 [shape = 'u32[144,128]{1,0:T(1,128)}', space=vmem, size = 0x12000, scoped, tag = 'internal scratch']
  %s0 = inlined_call_operand.vmem [shape: f32[8,768], index: 0, kind: input, shape index: {}]
  %s1 = inlined_call_operand.vmem [shape: f32[8,72], index: 1, kind: input, shape index: {}]
  %s2 = inlined_call_operand.vmem [shape: f32[16,1], index: 2, kind: input, shape index: {}]
  %s3 = inlined_call_operand.vmem [shape: f32[1,768], index: 3, kind: input, shape index: {}]
  %s4 = inlined_call_operand.vmem [shape: f32[8,768], index: 4, kind: output, shape index: {}]
  %s5 = sld [smem:[#allocation0]]
  $region26: #{resblock_forward.1} parent=0
    _
  %s7 = ssub.s32 1, %s5
  %s8 = scalar_select 0, %s7, %s5
  // Predicated region
  $region2: #{resblock_forward.1} parent=0 // pred_check
    _
  $region3: #{resblock_forward.1} parent=0 // pred_check_branch
    %10 = sbr.rel (0) target = $region5
  $region4: #{resblock_forward.1} parent=0 // pred_region
    _
  $region5: #{resblock_forward.1} parent=0 // pred_fallthru
    _
  // Predicated region
  $region6: #{resblock_forward.1} parent=0 // pred_check
    _
  $region7: #{resblock_forward.1} parent=0 // pred_check_branch
    %12 = sbr.rel (0) target = $region9
  $region8: #{resblock_forward.1} parent=0 // pred_region
    _
  $region9: #{resblock_forward.1} parent=0 // pred_fallthru
    _
  // Predicated region
  $region10: #{resblock_forward.1} parent=0 // pred_check
    _
  $region11: #{resblock_forward.1} parent=0 // pred_check_branch
    %14 = sbr.rel (0) target = $region13
  $region12: #{resblock_forward.1} parent=0 // pred_region
    _
  $region13: #{resblock_forward.1} parent=0 // pred_fallthru
    _
  // Predicated region
  $region14: #{resblock_forward.1} parent=0 // pred_check
    _
  $region15: #{resblock_forward.1} parent=0 // pred_check_branch
    %16 = sbr.rel (0) target = $region17
  $region16: #{resblock_forward.1} parent=0 // pred_region
    _
  $region17: #{resblock_forward.1} parent=0 // pred_fallthru
    _
  %v17 = vld [vmem:[%s0] sm:$0xff]
  %v18 = vld [vmem:[%s0 + $0x8] sm:$0xff]
  %v19 = vld [vmem:[%s0 + $0x10] sm:$0xff]
  %v20 = vld [vmem:[%s0 + $0x18] sm:$0xff]
  %v21 = vld [vmem:[%s0 + $0x20] sm:$0xff]
  %v22 = vld [vmem:[%s0 + $0x28] sm:$0xff]
  %v23 = vld [vmem:[%s1] sm:$0xff]
  %v24 = vld [vmem:[%s2] sm:$0xff]
  %v25 = vld [vmem:[%s2 + $0x8] sm:$0xff]
  %v26 = vld [vmem:[%s3] sm:$0x3f]
  %27 = vrot.lane.b32.xlu0 %v17, 19
  %v28 = vpop.permute.xlu0 %27
  %29 = vrot.lane.b32.xlu0 %v18, 19
  %v30 = vpop.permute.xlu0 %29
  %31 = vrot.lane.b32.xlu0 %v19, 19
  %v32 = vpop.permute.xlu0 %31
  %33 = vrot.lane.b32.xlu0 %v20, 19
  %v34 = vpop.permute.xlu0 %33
  %35 = vrot.lane.b32.xlu0 %v21, 19
  %v36 = vpop.permute.xlu0 %35
  %37 = vrot.lane.b32.xlu0 %v22, 19
  %v38 = vpop.permute.xlu0 %37
  %v39 = vlaneseq
  %v40 = vand.u32 %v39, 127
  %vm41 = vcmp.lt.s32.totalorder %v40, 19
  %v42 = vsel %vm41, %v36, %v38
  %v43 = vsel %vm41, %v34, %v36
  %v44 = vsel %vm41, %v32, %v34
  %v45 = vsel %vm41, %v30, %v32
  %v46 = vsel %vm41, %v28, %v30
  %v47 = vsel %vm41, %v38, %v28
  %48 = vrot.lane.b32.xlu0 %v17, 18
  %v49 = vpop.permute.xlu0 %48
  %50 = vrot.lane.b32.xlu0 %v18, 18
  %v51 = vpop.permute.xlu0 %50
  %52 = vrot.lane.b32.xlu0 %v19, 18
  %v53 = vpop.permute.xlu0 %52
  %54 = vrot.lane.b32.xlu0 %v20, 18
  %v55 = vpop.permute.xlu0 %54
  %56 = vrot.lane.b32.xlu0 %v21, 18
  %v57 = vpop.permute.xlu0 %56
  %58 = vrot.lane.b32.xlu0 %v22, 18
  %v59 = vpop.permute.xlu0 %58
  %vm60 = vcmp.lt.s32.totalorder %v40, 18
  %v61 = vsel %vm60, %v57, %v59
  %v62 = vsel %vm60, %v55, %v57
  %v63 = vsel %vm60, %v53, %v55
  %v64 = vsel %vm60, %v51, %v53
  %v65 = vsel %vm60, %v49, %v51
  %v66 = vsel %vm60, %v59, %v49
  %67 = vrot.lane.b32.xlu0 %v17, 17
  %v68 = vpop.permute.xlu0 %67
  %69 = vrot.lane.b32.xlu0 %v18, 17
  %v70 = vpop.permute.xlu0 %69
  %71 = vrot.lane.b32.xlu0 %v19, 17
  %v72 = vpop.permute.xlu0 %71
  %73 = vrot.lane.b32.xlu0 %v20, 17
  %v74 = vpop.permute.xlu0 %73
  %75 = vrot.lane.b32.xlu0 %v21, 17
  %v76 = vpop.permute.xlu0 %75
  %77 = vrot.lane.b32.xlu0 %v22, 17
  %v78 = vpop.permute.xlu0 %77
  %vm79 = vcmp.lt.s32.totalorder %v40, 17
  %v80 = vsel %vm79, %v76, %v78
  %v81 = vsel %vm79, %v74, %v76
  %v82 = vsel %vm79, %v72, %v74
  %v83 = vsel %vm79, %v70, %v72
  %v84 = vsel %vm79, %v68, %v70
  %v85 = vsel %vm79, %v78, %v68
  %86 = vrot.lane.b32.xlu0 %v17, 1
  %v87 = vpop.permute.xlu0 %86
  %88 = vrot.lane.b32.xlu0 %v18, 1
  %v89 = vpop.permute.xlu0 %88
  %90 = vrot.lane.b32.xlu0 %v19, 1
  %v91 = vpop.permute.xlu0 %90
  %92 = vrot.lane.b32.xlu0 %v20, 1
  %v93 = vpop.permute.xlu0 %92
  %94 = vrot.lane.b32.xlu0 %v21, 1
  %v95 = vpop.permute.xlu0 %94
  %96 = vrot.lane.b32.xlu0 %v22, 1
  %v97 = vpop.permute.xlu0 %96
  %vm98 = vcmp.lt.s32.totalorder %v40, 1
  %v99 = vsel %vm98, %v95, %v97
  %v100 = vsel %vm98, %v93, %v95
  %v101 = vsel %vm98, %v91, %v93
  %v102 = vsel %vm98, %v89, %v91
  %v103 = vsel %vm98, %v87, %v89
  %v104 = vsel %vm98, %v97, %v87
  %105 = vrot.lane.b32.xlu0 %v17, 127
  %v106 = vpop.permute.xlu0 %105
  %107 = vrot.lane.b32.xlu0 %v18, 127
  %v108 = vpop.permute.xlu0 %107
  %109 = vrot.lane.b32.xlu0 %v19, 127
  %v110 = vpop.permute.xlu0 %109
  %111 = vrot.lane.b32.xlu0 %v20, 127
  %v112 = vpop.permute.xlu0 %111
  %113 = vrot.lane.b32.xlu0 %v21, 127
  %v114 = vpop.permute.xlu0 %113
  %115 = vrot.lane.b32.xlu0 %v22, 127
  %v116 = vpop.permute.xlu0 %115
  %vm117 = vcmp.lt.s32.totalorder %v40, 127
  %v118 = vsel %vm117, %v114, %v116
  %v119 = vsel %vm117, %v112, %v114
  %v120 = vsel %vm117, %v110, %v112
  %v121 = vsel %vm117, %v108, %v110
  %v122 = vsel %vm117, %v106, %v108
  %v123 = vsel %vm117, %v116, %v106
  %124 = vrot.lane.b32.xlu0 %v17, 111
  %v125 = vpop.permute.xlu0 %124
  %126 = vrot.lane.b32.xlu0 %v18, 111
  %v127 = vpop.permute.xlu0 %126
  %128 = vrot.lane.b32.xlu0 %v19, 111
  %v129 = vpop.permute.xlu0 %128
  %130 = vrot.lane.b32.xlu0 %v20, 111
  %v131 = vpop.permute.xlu0 %130
  %132 = vrot.lane.b32.xlu0 %v21, 111
  %v133 = vpop.permute.xlu0 %132
  %134 = vrot.lane.b32.xlu0 %v22, 111
  %v135 = vpop.permute.xlu0 %134
  %vm136 = vcmp.lt.s32.totalorder %v40, 111
  %v137 = vsel %vm136, %v133, %v135
  %v138 = vsel %vm136, %v131, %v133
  %v139 = vsel %vm136, %v129, %v131
  %v140 = vsel %vm136, %v127, %v129
  %v141 = vsel %vm136, %v125, %v127
  %v142 = vsel %vm136, %v135, %v125
  %143 = vrot.lane.b32.xlu0 %v17, 110
  %v144 = vpop.permute.xlu0 %143
  %145 = vrot.lane.b32.xlu0 %v18, 110
  %v146 = vpop.permute.xlu0 %145
  %147 = vrot.lane.b32.xlu0 %v19, 110
  %v148 = vpop.permute.xlu0 %147
  %149 = vrot.lane.b32.xlu0 %v20, 110
  %v150 = vpop.permute.xlu0 %149
  %151 = vrot.lane.b32.xlu0 %v21, 110
  %v152 = vpop.permute.xlu0 %151
  %153 = vrot.lane.b32.xlu0 %v22, 110
  %v154 = vpop.permute.xlu0 %153
  %vm155 = vcmp.lt.s32.totalorder %v40, 110
  %v156 = vsel %vm155, %v152, %v154
  %v157 = vsel %vm155, %v150, %v152
  %v158 = vsel %vm155, %v148, %v150
  %v159 = vsel %vm155, %v146, %v148
  %v160 = vsel %vm155, %v144, %v146
  %v161 = vsel %vm155, %v154, %v144
  %162 = vrot.lane.b32.xlu0 %v17, 109
  %v163 = vpop.permute.xlu0 %162
  %164 = vrot.lane.b32.xlu0 %v18, 109
  %v165 = vpop.permute.xlu0 %164
  %166 = vrot.lane.b32.xlu0 %v19, 109
  %v167 = vpop.permute.xlu0 %166
  %168 = vrot.lane.b32.xlu0 %v20, 109
  %v169 = vpop.permute.xlu0 %168
  %170 = vrot.lane.b32.xlu0 %v21, 109
  %v171 = vpop.permute.xlu0 %170
  %172 = vrot.lane.b32.xlu0 %v22, 109
  %v173 = vpop.permute.xlu0 %172
  %vm174 = vcmp.lt.s32.totalorder %v40, 109
  %v175 = vsel %vm174, %v171, %v173
  %v176 = vsel %vm174, %v169, %v171
  %v177 = vsel %vm174, %v167, %v169
  %v178 = vsel %vm174, %v165, %v167
  %v179 = vsel %vm174, %v163, %v165
  %v180 = vsel %vm174, %v173, %v163
  %vm181 = vcmask 588800
  %v183 = vsel %vm181, %v23, 0
  %185 = vmatprep.subr.mxu0 %v46
  %186 = vmatpush1.msra.mxu0 %v47
  %187 = vmatprep.subr.mxu0 %v65
  %188 = vmatpush1.msra.mxu0 %v66
  %189 = vmatprep.subr.mxu0 %v84
  %190 = vmatpush1.msra.mxu0 %v85
  %191 = vmatprep.subr.mxu0 %v103
  %192 = vmatpush1.msra.mxu0 %v104
  %193 = vmatprep.subr.mxu0 %v18
  %194 = vmatpush1.msra.mxu0 %v17
  %195 = vmatprep.subr.mxu0 %v121
  %196 = vmatpush1.msra.mxu0 %v122
  %197 = vmatprep.subr.mxu0 %v140
  %198 = vmatpush1.msra.mxu0 %v141
  %199 = vmatprep.subr.mxu0 %v159
  %200 = vmatpush1.msra.mxu0 %v160
  %201 = vmatprep.subr.mxu0 %v178
  %202 = vmatpush1.msra.mxu0 %v179
  %203 = vmatprep.subr.mxu0 0.0
  %204 = vmatpush1.msra.mxu0 0.0
  %205 = vmatprep.subr.mxu0 0.0
  %206 = vmatpush1.msra.mxu0 0.0
  %207 = vmatprep.subr.mxu0 0.0
  %208 = vmatpush1.msra.mxu0 0.0
  %209 = vmatprep.subr.mxu0 0.0
  %210 = vmatpush1.msra.mxu0 0.0
  %211 = vmatprep.subr.mxu0 0.0
  %212 = vmatpush1.msra.mxu0 0.0
  %213 = vmatprep.subr.mxu0 0.0
  %214 = vmatpush1.msra.mxu0 0.0
  %215 = vmatprep.subr.mxu0 0.0
  %216 = vmatpush1.msra.mxu0 0.0
  %217 = vmatprep.subr.mxu0 0.0
  %218 = vmatpush1.msra.mxu0 0.0
  %219 = vmatprep.subr.mxu0 0.0
  %220 = vmatpush1.msra.mxu0 0.0
  %221 = vmatprep.subr.mxu0 0.0
  %222 = vmatpush1.msra.mxu0 0.0
  %223 = vmatprep.subr.mxu0 0.0
  %224 = vmatpush1.msra.mxu0 0.0
  %225 = vmatprep.subr.mxu0 0.0
  %226 = vmatpush1.msra.mxu0 0.0
  %227 = vmatprep.subr.mxu0 0.0
  %228 = vmatpush1.msra.mxu0 0.0
  %229 = vmatprep.subr.mxu0 0.0
  %230 = vmatpush1.msra.mxu0 0.0
  %231 = vmatprep.subr.mxu0 0.0
  %232 = vmatpush1.msra.mxu0 0.0
  %233 = vmatprep.subr.mxu0 0.0
  %234 = vmatpush1.msra.mxu0 0.0
  %235 = vmatprep.subr.mxu0 0.0
  %236 = vmatpush1.msra.mxu0 0.0
  %237 = vmatprep.subr.mxu0 0.0
  %238 = vmatpush1.msra.mxu0 0.0
  %239 = vmatprep.subr.mxu0 0.0
  %240 = vmatpush1.msra.mxu0 0.0
  %241 = vmatprep.subr.mxu0 0.0
  %242 = vmatpush1.msra.mxu0 0.0
  %243 = vmatprep.subr.mxu0 0.0
  %244 = vmatpush1.msra.mxu0 0.0
  %245 = vmatprep.subr.mxu0 0.0
  %246 = vmatpush1.msra.mxu0 0.0
  %247 = vmatprep.subr.mxu0 0.0
  %248 = vmatpush1.msra.mxu0 0.0
  %249 = vmatprep.mubr.f32.mxu0 0.0
  %250 = vmatmul.mubr.f32.gmra.mrb[0].mxu0 %v183
  %v251 = vpop.f32.mrb[0].mxu0
  %v252 = vadd.f32 0.0, %v251
  %v253 = vpop.f32.mrb[0].mxu0
  %v254 = vadd.f32 0.0, %v253
  %255 = vdwg.mxu0
  %256 = vmatprep.subr.mxu0 %v44
  %257 = vmatpush1.msra.mxu0 %v45
  %258 = vmatprep.subr.mxu0 %v63
  %259 = vmatpush1.msra.mxu0 %v64
  %260 = vmatprep.subr.mxu0 %v82
  %261 = vmatpush1.msra.mxu0 %v83
  %262 = vmatprep.subr.mxu0 %v101
  %263 = vmatpush1.msra.mxu0 %v102
  %264 = vmatprep.subr.mxu0 %v20
  %265 = vmatpush1.msra.mxu0 %v19
  %266 = vmatprep.subr.mxu0 %v119
  %267 = vmatpush1.msra.mxu0 %v120
  %268 = vmatprep.subr.mxu0 %v138
  %269 = vmatpush1.msra.mxu0 %v139
  %270 = vmatprep.subr.mxu0 %v157
  %271 = vmatpush1.msra.mxu0 %v158
  %272 = vmatprep.subr.mxu0 %v176
  %273 = vmatpush1.msra.mxu0 %v177
  %274 = vmatprep.subr.mxu0 0.0
  %275 = vmatpush1.msra.mxu0 0.0
  %276 = vmatprep.subr.mxu0 0.0
  %277 = vmatpush1.msra.mxu0 0.0
  %278 = vmatprep.subr.mxu0 0.0
  %279 = vmatpush1.msra.mxu0 0.0
  %280 = vmatprep.subr.mxu0 0.0
  %281 = vmatpush1.msra.mxu0 0.0
  %282 = vmatprep.subr.mxu0 0.0
  %283 = vmatpush1.msra.mxu0 0.0
  %284 = vmatprep.subr.mxu0 0.0
  %285 = vmatpush1.msra.mxu0 0.0
  %286 = vmatprep.subr.mxu0 0.0
  %287 = vmatpush1.msra.mxu0 0.0
  %288 = vmatprep.subr.mxu0 0.0
  %289 = vmatpush1.msra.mxu0 0.0
  %290 = vmatprep.subr.mxu0 0.0
  %291 = vmatpush1.msra.mxu0 0.0
  %292 = vmatprep.subr.mxu0 0.0
  %293 = vmatpush1.msra.mxu0 0.0
  %294 = vmatprep.subr.mxu0 0.0
  %295 = vmatpush1.msra.mxu0 0.0
  %296 = vmatprep.subr.mxu0 0.0
  %297 = vmatpush1.msra.mxu0 0.0
  %298 = vmatprep.subr.mxu0 0.0
  %299 = vmatpush1.msra.mxu0 0.0
  %300 = vmatprep.subr.mxu0 0.0
  %301 = vmatpush1.msra.mxu0 0.0
  %302 = vmatprep.subr.mxu0 0.0
  %303 = vmatpush1.msra.mxu0 0.0
  %304 = vmatprep.subr.mxu0 0.0
  %305 = vmatpush1.msra.mxu0 0.0
  %306 = vmatprep.subr.mxu0 0.0
  %307 = vmatpush1.msra.mxu0 0.0
  %308 = vmatprep.subr.mxu0 0.0
  %309 = vmatpush1.msra.mxu0 0.0
  %310 = vmatprep.subr.mxu0 0.0
  %311 = vmatpush1.msra.mxu0 0.0
  %312 = vmatprep.subr.mxu0 0.0
  %313 = vmatpush1.msra.mxu0 0.0
  %314 = vmatprep.subr.mxu0 0.0
  %315 = vmatpush1.msra.mxu0 0.0
  %316 = vmatprep.subr.mxu0 0.0
  %317 = vmatpush1.msra.mxu0 0.0
  %318 = vmatprep.subr.mxu0 0.0
  %319 = vmatpush1.msra.mxu0 0.0
  %320 = vmatprep.mubr.f32.mxu0 0.0
  %321 = vmatmul.mubr.f32.gmra.mrb[0].mxu0 %v183
  %v322 = vpop.f32.mrb[0].mxu0
  %v323 = vadd.f32 0.0, %v322
  %v324 = vpop.f32.mrb[0].mxu0
  %v325 = vadd.f32 0.0, %v324
  %326 = vdwg.mxu0
  %327 = vmatprep.subr.mxu0 %v42
  %328 = vmatpush1.msra.mxu0 %v43
  %329 = vmatprep.subr.mxu0 %v61
  %330 = vmatpush1.msra.mxu0 %v62
  %331 = vmatprep.subr.mxu0 %v80
  %332 = vmatpush1.msra.mxu0 %v81
  %333 = vmatprep.subr.mxu0 %v99
  %334 = vmatpush1.msra.mxu0 %v100
  %335 = vmatprep.subr.mxu0 %v22
  %336 = vmatpush1.msra.mxu0 %v21
  %337 = vmatprep.subr.mxu0 %v123
  %338 = vmatpush1.msra.mxu0 %v118
  %339 = vmatprep.subr.mxu0 %v142
  %340 = vmatpush1.msra.mxu0 %v137
  %341 = vmatprep.subr.mxu0 %v161
  %342 = vmatpush1.msra.mxu0 %v156
  %343 = vmatprep.subr.mxu0 %v180
  %344 = vmatpush1.msra.mxu0 %v175
  %345 = vmatprep.subr.mxu0 0.0
  %346 = vmatpush1.msra.mxu0 0.0
  %347 = vmatprep.subr.mxu0 0.0
  %348 = vmatpush1.msra.mxu0 0.0
  %349 = vmatprep.subr.mxu0 0.0
  %350 = vmatpush1.msra.mxu0 0.0
  %351 = vmatprep.subr.mxu0 0.0
  %352 = vmatpush1.msra.mxu0 0.0
  %353 = vmatprep.subr.mxu0 0.0
  %354 = vmatpush1.msra.mxu0 0.0
  %355 = vmatprep.subr.mxu0 0.0
  %356 = vmatpush1.msra.mxu0 0.0
  %357 = vmatprep.subr.mxu0 0.0
  %358 = vmatpush1.msra.mxu0 0.0
  %359 = vmatprep.subr.mxu0 0.0
  %360 = vmatpush1.msra.mxu0 0.0
  %361 = vmatprep.subr.mxu0 0.0
  %362 = vmatpush1.msra.mxu0 0.0
  %363 = vmatprep.subr.mxu0 0.0
  %364 = vmatpush1.msra.mxu0 0.0
  %365 = vmatprep.subr.mxu0 0.0
  %366 = vmatpush1.msra.mxu0 0.0
  %367 = vmatprep.subr.mxu0 0.0
  %368 = vmatpush1.msra.mxu0 0.0
  %369 = vmatprep.subr.mxu0 0.0
  %370 = vmatpush1.msra.mxu0 0.0
  %371 = vmatprep.subr.mxu0 0.0
  %372 = vmatpush1.msra.mxu0 0.0
  %373 = vmatprep.subr.mxu0 0.0
  %374 = vmatpush1.msra.mxu0 0.0
  %375 = vmatprep.subr.mxu0 0.0
  %376 = vmatpush1.msra.mxu0 0.0
  %377 = vmatprep.subr.mxu0 0.0
  %378 = vmatpush1.msra.mxu0 0.0
  %379 = vmatprep.subr.mxu0 0.0
  %380 = vmatpush1.msra.mxu0 0.0
  %381 = vmatprep.subr.mxu0 0.0
  %382 = vmatpush1.msra.mxu0 0.0
  %383 = vmatprep.subr.mxu0 0.0
  %384 = vmatpush1.msra.mxu0 0.0
  %385 = vmatprep.subr.mxu0 0.0
  %386 = vmatpush1.msra.mxu0 0.0
  %387 = vmatprep.subr.mxu0 0.0
  %388 = vmatpush1.msra.mxu0 0.0
  %389 = vmatprep.subr.mxu0 0.0
  %390 = vmatpush1.msra.mxu0 0.0
  %391 = vmatprep.mubr.f32.mxu0 0.0
  %392 = vmatmul.mubr.f32.gmra.mrb[0].mxu0 %v183
  %v393 = vpop.f32.mrb[0].mxu0
  %v394 = vadd.f32 0.0, %v393
  %v395 = vpop.f32.mrb[0].mxu0
  %v396 = vadd.f32 0.0, %v395
  %397 = vdwg.mxu0
  %v399 = vlaneseq
  %v400 = vshrl.u32 %v399, 7
  %v401 = vsub.s32 0, %v400
  %v402 = vrot.slane %v26, %v401
  %v403 = vlaneseq
  %v404 = vshrl.u32 %v403, 7
  %v405 = vsub.s32 1, %v404
  %v406 = vrot.slane %v26, %v405
  %v407 = vlaneseq
  %v408 = vshrl.u32 %v407, 7
  %v409 = vsub.s32 2, %v408
  %v410 = vrot.slane %v26, %v409
  %v411 = vlaneseq
  %v412 = vshrl.u32 %v411, 7
  %v413 = vsub.s32 3, %v412
  %v414 = vrot.slane %v26, %v413
  %v415 = vlaneseq
  %v416 = vshrl.u32 %v415, 7
  %v417 = vsub.s32 4, %v416
  %v418 = vrot.slane %v26, %v417
  %v419 = vlaneseq
  %v420 = vshrl.u32 %v419, 7
  %v421 = vsub.s32 5, %v420
  %v422 = vrot.slane %v26, %v421
  %v429 = vmul.f32 %v252, %v402
  %v430 = vmul.f32 %v254, %v406
  %v431 = vmul.f32 %v323, %v410
  %v432 = vmul.f32 %v325, %v414
  %v433 = vmul.f32 %v394, %v418
  %v434 = vmul.f32 %v396, %v422
  %v435 = vadd.f32 %v429, %v430
  %v436 = vadd.f32 %v435, %v431
  %v437 = vadd.f32 %v436, %v432
  %v438 = vadd.f32 %v437, %v433
  %v439 = vadd.f32 %v438, %v434
  %440 = vadd.xlane.f32.xlu0 %v439
  %v441 = vpop.xlane.xlu0 %440
  %v442 = vmul.f32 %v429, %v429
  %v443 = vmul.f32 %v430, %v430
  %v444 = vmul.f32 %v431, %v431
  %v445 = vmul.f32 %v432, %v432
  %v446 = vmul.f32 %v433, %v433
  %v447 = vmul.f32 %v434, %v434
  %v448 = vadd.f32 %v442, %v443
  %v449 = vadd.f32 %v448, %v444
  %v450 = vadd.f32 %v449, %v445
  %v451 = vadd.f32 %v450, %v446
  %v452 = vadd.f32 %v451, %v447
  %453 = vadd.xlane.f32.xlu0 %v452
  %v454 = vpop.xlane.xlu0 %453
  %v455 = vmul.f32 %v441, 0.001953125
  %v456 = vmul.f32 %v454, 0.001953125
  %v457 = vmul.f32 %v455, %v455
  %v458 = vsub.f32 %v456, %v457
  %v459 = vmax.f32 %v458, 0.0
  %v460 = vadd.f32 %v459, 1e-05
  %v461 = vrsqrt.pop %v460
  %v462 = vmul.f32 %v461, %v24
  %v463 = vmul.f32 %v455, %v462
  %v464 = vsub.f32 %v25, %v463
  %466 = vset.pattern.permute.xlu0 0
  %467 = vperm.xlu0 %466, %v462
  %v468 = vpop.permute.xlu0 %467
  %v470 = vmul.f32 %v252, %v468
  %v471 = vmul.f32 %v254, %v468
  %v472 = vmul.f32 %v323, %v468
  %v473 = vmul.f32 %v325, %v468
  %v474 = vmul.f32 %v394, %v468
  %v475 = vmul.f32 %v396, %v468
  %477 = vset.pattern.permute.xlu0 0
  %478 = vperm.xlu0 %477, %v464
  %v479 = vpop.permute.xlu0 %478
  %v481 = vadd.f32 %v470, %v479
  %v482 = vadd.f32 %v471, %v479
  %v483 = vadd.f32 %v472, %v479
  %v484 = vadd.f32 %v473, %v479
  %v485 = vadd.f32 %v474, %v479
  %v486 = vadd.f32 %v475, %v479
  %v487 = vmax.f32 %v481, 0.0
  %v488 = vmax.f32 %v482, 0.0
  %v489 = vmax.f32 %v483, 0.0
  %v490 = vmax.f32 %v484, 0.0
  %v491 = vmax.f32 %v485, 0.0
  %v492 = vmax.f32 %v486, 0.0
  %v493 = vmul.f32 %v487, %v402
  %v494 = vmul.f32 %v488, %v406
  %v495 = vmul.f32 %v489, %v410
  %v496 = vmul.f32 %v490, %v414
  %v497 = vmul.f32 %v491, %v418
  %v498 = vmul.f32 %v492, %v422
  %499 = vrot.lane.b32.xlu0 %v493, 19
  %v500 = vpop.permute.xlu0 %499
  %501 = vrot.lane.b32.xlu0 %v494, 19
  %v502 = vpop.permute.xlu0 %501
  %503 = vrot.lane.b32.xlu0 %v495, 19
  %v504 = vpop.permute.xlu0 %503
  %505 = vrot.lane.b32.xlu0 %v496, 19
  %v506 = vpop.permute.xlu0 %505
  %507 = vrot.lane.b32.xlu0 %v497, 19
  %v508 = vpop.permute.xlu0 %507
  %509 = vrot.lane.b32.xlu0 %v498, 19
  %v510 = vpop.permute.xlu0 %509
  %v511 = vsel %vm41, %v508, %v510
  %v512 = vsel %vm41, %v506, %v508
  %v513 = vsel %vm41, %v504, %v506
  %v514 = vsel %vm41, %v502, %v504
  %v515 = vsel %vm41, %v500, %v502
  %v516 = vsel %vm41, %v510, %v500
  %517 = vrot.lane.b32.xlu0 %v493, 18
  %v518 = vpop.permute.xlu0 %517
  %519 = vrot.lane.b32.xlu0 %v494, 18
  %v520 = vpop.permute.xlu0 %519
  %521 = vrot.lane.b32.xlu0 %v495, 18
  %v522 = vpop.permute.xlu0 %521
  %523 = vrot.lane.b32.xlu0 %v496, 18
  %v524 = vpop.permute.xlu0 %523
  %525 = vrot.lane.b32.xlu0 %v497, 18
  %v526 = vpop.permute.xlu0 %525
  %527 = vrot.lane.b32.xlu0 %v498, 18
  %v528 = vpop.permute.xlu0 %527
  %v529 = vsel %vm60, %v526, %v528
  %v530 = vsel %vm60, %v524, %v526
  %v531 = vsel %vm60, %v522, %v524
  %v532 = vsel %vm60, %v520, %v522
  %v533 = vsel %vm60, %v518, %v520
  %v534 = vsel %vm60, %v528, %v518
  %535 = vrot.lane.b32.xlu0 %v493, 17
  %v536 = vpop.permute.xlu0 %535
  %537 = vrot.lane.b32.xlu0 %v494, 17
  %v538 = vpop.permute.xlu0 %537
  %539 = vrot.lane.b32.xlu0 %v495, 17
  %v540 = vpop.permute.xlu0 %539
  %541 = vrot.lane.b32.xlu0 %v496, 17
  %v542 = vpop.permute.xlu0 %541
  %543 = vrot.lane.b32.xlu0 %v497, 17
  %v544 = vpop.permute.xlu0 %543
  %545 = vrot.lane.b32.xlu0 %v498, 17
  %v546 = vpop.permute.xlu0 %545
  %v547 = vsel %vm79, %v544, %v546
  %v548 = vsel %vm79, %v542, %v544
  %v549 = vsel %vm79, %v540, %v542
  %v550 = vsel %vm79, %v538, %v540
  %v551 = vsel %vm79, %v536, %v538
  %v552 = vsel %vm79, %v546, %v536
  %553 = vrot.lane.b32.xlu0 %v493, 1
  %v554 = vpop.permute.xlu0 %553
  %555 = vrot.lane.b32.xlu0 %v494, 1
  %v556 = vpop.permute.xlu0 %555
  %557 = vrot.lane.b32.xlu0 %v495, 1
  %v558 = vpop.permute.xlu0 %557
  %559 = vrot.lane.b32.xlu0 %v496, 1
  %v560 = vpop.permute.xlu0 %559
  %561 = vrot.lane.b32.xlu0 %v497, 1
  %v562 = vpop.permute.xlu0 %561
  %563 = vrot.lane.b32.xlu0 %v498, 1
  %v564 = vpop.permute.xlu0 %563
  %v565 = vsel %vm98, %v562, %v564
  %v566 = vsel %vm98, %v560, %v562
  %v567 = vsel %vm98, %v558, %v560
  %v568 = vsel %vm98, %v556, %v558
  %v569 = vsel %vm98, %v554, %v556
  %v570 = vsel %vm98, %v564, %v554
  %571 = vrot.lane.b32.xlu0 %v493, 127
  %v572 = vpop.permute.xlu0 %571
  %573 = vrot.lane.b32.xlu0 %v494, 127
  %v574 = vpop.permute.xlu0 %573
  %575 = vrot.lane.b32.xlu0 %v495, 127
  %v576 = vpop.permute.xlu0 %575
  %577 = vrot.lane.b32.xlu0 %v496, 127
  %v578 = vpop.permute.xlu0 %577
  %579 = vrot.lane.b32.xlu0 %v497, 127
  %v580 = vpop.permute.xlu0 %579
  %581 = vrot.lane.b32.xlu0 %v498, 127
  %v582 = vpop.permute.xlu0 %581
  %v583 = vsel %vm117, %v580, %v582
  %v584 = vsel %vm117, %v578, %v580
  %v585 = vsel %vm117, %v576, %v578
  %v586 = vsel %vm117, %v574, %v576
  %v587 = vsel %vm117, %v572, %v574
  %v588 = vsel %vm117, %v582, %v572
  %589 = vrot.lane.b32.xlu0 %v493, 111
  %v590 = vpop.permute.xlu0 %589
  %591 = vrot.lane.b32.xlu0 %v494, 111
  %v592 = vpop.permute.xlu0 %591
  %593 = vrot.lane.b32.xlu0 %v495, 111
  %v594 = vpop.permute.xlu0 %593
  %595 = vrot.lane.b32.xlu0 %v496, 111
  %v596 = vpop.permute.xlu0 %595
  %597 = vrot.lane.b32.xlu0 %v497, 111
  %v598 = vpop.permute.xlu0 %597
  %599 = vrot.lane.b32.xlu0 %v498, 111
  %v600 = vpop.permute.xlu0 %599
  %v601 = vsel %vm136, %v598, %v600
  %v602 = vsel %vm136, %v596, %v598
  %v603 = vsel %vm136, %v594, %v596
  %v604 = vsel %vm136, %v592, %v594
  %v605 = vsel %vm136, %v590, %v592
  %v606 = vsel %vm136, %v600, %v590
  %607 = vrot.lane.b32.xlu0 %v493, 110
  %v608 = vpop.permute.xlu0 %607
  %609 = vrot.lane.b32.xlu0 %v494, 110
  %v610 = vpop.permute.xlu0 %609
  %611 = vrot.lane.b32.xlu0 %v495, 110
  %v612 = vpop.permute.xlu0 %611
  %613 = vrot.lane.b32.xlu0 %v496, 110
  %v614 = vpop.permute.xlu0 %613
  %615 = vrot.lane.b32.xlu0 %v497, 110
  %v616 = vpop.permute.xlu0 %615
  %617 = vrot.lane.b32.xlu0 %v498, 110
  %v618 = vpop.permute.xlu0 %617
  %v619 = vsel %vm155, %v616, %v618
  %v620 = vsel %vm155, %v614, %v616
  %v621 = vsel %vm155, %v612, %v614
  %v622 = vsel %vm155, %v610, %v612
  %v623 = vsel %vm155, %v608, %v610
  %v624 = vsel %vm155, %v618, %v608
  %625 = vrot.lane.b32.xlu0 %v493, 109
  %v626 = vpop.permute.xlu0 %625
  %627 = vrot.lane.b32.xlu0 %v494, 109
  %v628 = vpop.permute.xlu0 %627
  %629 = vrot.lane.b32.xlu0 %v495, 109
  %v630 = vpop.permute.xlu0 %629
  %631 = vrot.lane.b32.xlu0 %v496, 109
  %v632 = vpop.permute.xlu0 %631
  %633 = vrot.lane.b32.xlu0 %v497, 109
  %v634 = vpop.permute.xlu0 %633
  %635 = vrot.lane.b32.xlu0 %v498, 109
  %v636 = vpop.permute.xlu0 %635
  %v637 = vsel %vm174, %v634, %v636
  %v638 = vsel %vm174, %v632, %v634
  %v639 = vsel %vm174, %v630, %v632
  %v640 = vsel %vm174, %v628, %v630
  %v641 = vsel %vm174, %v626, %v628
  %v642 = vsel %vm174, %v636, %v626
  %643 = vmatprep.subr.mxu0 %v515
  %644 = vmatpush1.msra.mxu0 %v516
  %645 = vmatprep.subr.mxu0 %v533
  %646 = vmatpush1.msra.mxu0 %v534
  %647 = vmatprep.subr.mxu0 %v551
  %648 = vmatpush1.msra.mxu0 %v552
  %649 = vmatprep.subr.mxu0 %v569
  %650 = vmatpush1.msra.mxu0 %v570
  %651 = vmatprep.subr.mxu0 %v494
  %652 = vmatpush1.msra.mxu0 %v493
  %653 = vmatprep.subr.mxu0 %v586
  %654 = vmatpush1.msra.mxu0 %v587
  %655 = vmatprep.subr.mxu0 %v604
  %656 = vmatpush1.msra.mxu0 %v605
  %657 = vmatprep.subr.mxu0 %v622
  %658 = vmatpush1.msra.mxu0 %v623
  %659 = vmatprep.subr.mxu0 %v640
  %660 = vmatpush1.msra.mxu0 %v641
  %661 = vmatprep.subr.mxu0 0.0
  %662 = vmatpush1.msra.mxu0 0.0
  %663 = vmatprep.subr.mxu0 0.0
  %664 = vmatpush1.msra.mxu0 0.0
  %665 = vmatprep.subr.mxu0 0.0
  %666 = vmatpush1.msra.mxu0 0.0
  %667 = vmatprep.subr.mxu0 0.0
  %668 = vmatpush1.msra.mxu0 0.0
  %669 = vmatprep.subr.mxu0 0.0
  %670 = vmatpush1.msra.mxu0 0.0
  %671 = vmatprep.subr.mxu0 0.0
  %672 = vmatpush1.msra.mxu0 0.0
  %673 = vmatprep.subr.mxu0 0.0
  %674 = vmatpush1.msra.mxu0 0.0
  %675 = vmatprep.subr.mxu0 0.0
  %676 = vmatpush1.msra.mxu0 0.0
  %677 = vmatprep.subr.mxu0 0.0
  %678 = vmatpush1.msra.mxu0 0.0
  %679 = vmatprep.subr.mxu0 0.0
  %680 = vmatpush1.msra.mxu0 0.0
  %681 = vmatprep.subr.mxu0 0.0
  %682 = vmatpush1.msra.mxu0 0.0
  %683 = vmatprep.subr.mxu0 0.0
  %684 = vmatpush1.msra.mxu0 0.0
  %685 = vmatprep.subr.mxu0 0.0
  %686 = vmatpush1.msra.mxu0 0.0
  %687 = vmatprep.subr.mxu0 0.0
  %688 = vmatpush1.msra.mxu0 0.0
  %689 = vmatprep.subr.mxu0 0.0
  %690 = vmatpush1.msra.mxu0 0.0
  %691 = vmatprep.subr.mxu0 0.0
  %692 = vmatpush1.msra.mxu0 0.0
  %693 = vmatprep.subr.mxu0 0.0
  %694 = vmatpush1.msra.mxu0 0.0
  %695 = vmatprep.subr.mxu0 0.0
  %696 = vmatpush1.msra.mxu0 0.0
  %697 = vmatprep.subr.mxu0 0.0
  %698 = vmatpush1.msra.mxu0 0.0
  %699 = vmatprep.subr.mxu0 0.0
  %700 = vmatpush1.msra.mxu0 0.0
  %701 = vmatprep.subr.mxu0 0.0
  %702 = vmatpush1.msra.mxu0 0.0
  %703 = vmatprep.subr.mxu0 0.0
  %704 = vmatpush1.msra.mxu0 0.0
  %705 = vmatprep.subr.mxu0 0.0
  %706 = vmatpush1.msra.mxu0 0.0
  %707 = vmatprep.mubr.f32.mxu0 0.0
  %708 = vmatmul.mubr.f32.gmra.mrb[0].mxu0 %v183
  %v709 = vpop.f32.mrb[0].mxu0
  %v710 = vadd.f32 0.0, %v709
  %v711 = vpop.f32.mrb[0].mxu0
  %v712 = vadd.f32 0.0, %v711
  %713 = vdwg.mxu0
  %714 = vmatprep.subr.mxu0 %v513
  %715 = vmatpush1.msra.mxu0 %v514
  %716 = vmatprep.subr.mxu0 %v531
  %717 = vmatpush1.msra.mxu0 %v532
  %718 = vmatprep.subr.mxu0 %v549
  %719 = vmatpush1.msra.mxu0 %v550
  %720 = vmatprep.subr.mxu0 %v567
  %721 = vmatpush1.msra.mxu0 %v568
  %722 = vmatprep.subr.mxu0 %v496
  %723 = vmatpush1.msra.mxu0 %v495
  %724 = vmatprep.subr.mxu0 %v584
  %725 = vmatpush1.msra.mxu0 %v585
  %726 = vmatprep.subr.mxu0 %v602
  %727 = vmatpush1.msra.mxu0 %v603
  %728 = vmatprep.subr.mxu0 %v620
  %729 = vmatpush1.msra.mxu0 %v621
  %730 = vmatprep.subr.mxu0 %v638
  %731 = vmatpush1.msra.mxu0 %v639
  %732 = vmatprep.subr.mxu0 0.0
  %733 = vmatpush1.msra.mxu0 0.0
  %734 = vmatprep.subr.mxu0 0.0
  %735 = vmatpush1.msra.mxu0 0.0
  %736 = vmatprep.subr.mxu0 0.0
  %737 = vmatpush1.msra.mxu0 0.0
  %738 = vmatprep.subr.mxu0 0.0
  %739 = vmatpush1.msra.mxu0 0.0
  %740 = vmatprep.subr.mxu0 0.0
  %741 = vmatpush1.msra.mxu0 0.0
  %742 = vmatprep.subr.mxu0 0.0
  %743 = vmatpush1.msra.mxu0 0.0
  %744 = vmatprep.subr.mxu0 0.0
  %745 = vmatpush1.msra.mxu0 0.0
  %746 = vmatprep.subr.mxu0 0.0
  %747 = vmatpush1.msra.mxu0 0.0
  %748 = vmatprep.subr.mxu0 0.0
  %749 = vmatpush1.msra.mxu0 0.0
  %750 = vmatprep.subr.mxu0 0.0
  %751 = vmatpush1.msra.mxu0 0.0
  %752 = vmatprep.subr.mxu0 0.0
  %753 = vmatpush1.msra.mxu0 0.0
  %754 = vmatprep.subr.mxu0 0.0
  %755 = vmatpush1.msra.mxu0 0.0
  %756 = vmatprep.subr.mxu0 0.0
  %757 = vmatpush1.msra.mxu0 0.0
  %758 = vmatprep.subr.mxu0 0.0
  %759 = vmatpush1.msra.mxu0 0.0
  %760 = vmatprep.subr.mxu0 0.0
  %761 = vmatpush1.msra.mxu0 0.0
  %762 = vmatprep.subr.mxu0 0.0
  %763 = vmatpush1.msra.mxu0 0.0
  %764 = vmatprep.subr.mxu0 0.0
  %765 = vmatpush1.msra.mxu0 0.0
  %766 = vmatprep.subr.mxu0 0.0
  %767 = vmatpush1.msra.mxu0 0.0
  %768 = vmatprep.subr.mxu0 0.0
  %769 = vmatpush1.msra.mxu0 0.0
  %770 = vmatprep.subr.mxu0 0.0
  %771 = vmatpush1.msra.mxu0 0.0
  %772 = vmatprep.subr.mxu0 0.0
  %773 = vmatpush1.msra.mxu0 0.0
  %774 = vmatprep.subr.mxu0 0.0
  %775 = vmatpush1.msra.mxu0 0.0
  %776 = vmatprep.subr.mxu0 0.0
  %777 = vmatpush1.msra.mxu0 0.0
  %778 = vmatprep.mubr.f32.mxu0 0.0
  %779 = vmatmul.mubr.f32.gmra.mrb[0].mxu0 %v183
  %v780 = vpop.f32.mrb[0].mxu0
  %v781 = vadd.f32 0.0, %v780
  %v782 = vpop.f32.mrb[0].mxu0
  %v783 = vadd.f32 0.0, %v782
  %784 = vdwg.mxu0
  %785 = vmatprep.subr.mxu0 %v511
  %786 = vmatpush1.msra.mxu0 %v512
  %787 = vmatprep.subr.mxu0 %v529
  %788 = vmatpush1.msra.mxu0 %v530
  %789 = vmatprep.subr.mxu0 %v547
  %790 = vmatpush1.msra.mxu0 %v548
  %791 = vmatprep.subr.mxu0 %v565
  %792 = vmatpush1.msra.mxu0 %v566
  %793 = vmatprep.subr.mxu0 %v498
  %794 = vmatpush1.msra.mxu0 %v497
  %795 = vmatprep.subr.mxu0 %v588
  %796 = vmatpush1.msra.mxu0 %v583
  %797 = vmatprep.subr.mxu0 %v606
  %798 = vmatpush1.msra.mxu0 %v601
  %799 = vmatprep.subr.mxu0 %v624
  %800 = vmatpush1.msra.mxu0 %v619
  %801 = vmatprep.subr.mxu0 %v642
  %802 = vmatpush1.msra.mxu0 %v637
  %803 = vmatprep.subr.mxu0 0.0
  %804 = vmatpush1.msra.mxu0 0.0
  %805 = vmatprep.subr.mxu0 0.0
  %806 = vmatpush1.msra.mxu0 0.0
  %807 = vmatprep.subr.mxu0 0.0
  %808 = vmatpush1.msra.mxu0 0.0
  %809 = vmatprep.subr.mxu0 0.0
  %810 = vmatpush1.msra.mxu0 0.0
  %811 = vmatprep.subr.mxu0 0.0
  %812 = vmatpush1.msra.mxu0 0.0
  %813 = vmatprep.subr.mxu0 0.0
  %814 = vmatpush1.msra.mxu0 0.0
  %815 = vmatprep.subr.mxu0 0.0
  %816 = vmatpush1.msra.mxu0 0.0
  %817 = vmatprep.subr.mxu0 0.0
  %818 = vmatpush1.msra.mxu0 0.0
  %819 = vmatprep.subr.mxu0 0.0
  %820 = vmatpush1.msra.mxu0 0.0
  %821 = vmatprep.subr.mxu0 0.0
  %822 = vmatpush1.msra.mxu0 0.0
  %823 = vmatprep.subr.mxu0 0.0
  %824 = vmatpush1.msra.mxu0 0.0
  %825 = vmatprep.subr.mxu0 0.0
  %826 = vmatpush1.msra.mxu0 0.0
  %827 = vmatprep.subr.mxu0 0.0
  %828 = vmatpush1.msra.mxu0 0.0
  %829 = vmatprep.subr.mxu0 0.0
  %830 = vmatpush1.msra.mxu0 0.0
  %831 = vmatprep.subr.mxu0 0.0
  %832 = vmatpush1.msra.mxu0 0.0
  %833 = vmatprep.subr.mxu0 0.0
  %834 = vmatpush1.msra.mxu0 0.0
  %835 = vmatprep.subr.mxu0 0.0
  %836 = vmatpush1.msra.mxu0 0.0
  %837 = vmatprep.subr.mxu0 0.0
  %838 = vmatpush1.msra.mxu0 0.0
  %839 = vmatprep.subr.mxu0 0.0
  %840 = vmatpush1.msra.mxu0 0.0
  %841 = vmatprep.subr.mxu0 0.0
  %842 = vmatpush1.msra.mxu0 0.0
  %843 = vmatprep.subr.mxu0 0.0
  %844 = vmatpush1.msra.mxu0 0.0
  %845 = vmatprep.subr.mxu0 0.0
  %846 = vmatpush1.msra.mxu0 0.0
  %847 = vmatprep.subr.mxu0 0.0
  %848 = vmatpush1.msra.mxu0 0.0
  %849 = vmatprep.mubr.f32.mxu0 0.0
  %850 = vmatmul.mubr.f32.gmra.mrb[0].mxu0 %v183
  %v851 = vpop.f32.mrb[0].mxu0
  %v852 = vadd.f32 0.0, %v851
  %v853 = vpop.f32.mrb[0].mxu0
  %v854 = vadd.f32 0.0, %v853
  %855 = vdwg.mxu0
  %v856 = vmul.f32 %v710, %v402
  %v857 = vmul.f32 %v712, %v406
  %v858 = vmul.f32 %v781, %v410
  %v859 = vmul.f32 %v783, %v414
  %v860 = vmul.f32 %v852, %v418
  %v861 = vmul.f32 %v854, %v422
  %v862 = vadd.f32 %v856, %v857
  %v863 = vadd.f32 %v862, %v858
  %v864 = vadd.f32 %v863, %v859
  %v865 = vadd.f32 %v864, %v860
  %v866 = vadd.f32 %v865, %v861
  %867 = vadd.xlane.f32.xlu0 %v866
  %v868 = vpop.xlane.xlu0 %867
  %v869 = vmul.f32 %v856, %v856
  %v870 = vmul.f32 %v857, %v857
  %v871 = vmul.f32 %v858, %v858
  %v872 = vmul.f32 %v859, %v859
  %v873 = vmul.f32 %v860, %v860
  %v874 = vmul.f32 %v861, %v861
  %v875 = vadd.f32 %v869, %v870
  %v876 = vadd.f32 %v875, %v871
  %v877 = vadd.f32 %v876, %v872
  %v878 = vadd.f32 %v877, %v873
  %v879 = vadd.f32 %v878, %v874
  %880 = vadd.xlane.f32.xlu0 %v879
  %v881 = vpop.xlane.xlu0 %880
  %v882 = vmul.f32 %v868, 0.001953125
  %v883 = vmul.f32 %v881, 0.001953125
  %v884 = vmul.f32 %v882, %v882
  %v885 = vsub.f32 %v883, %v884
  %v886 = vmax.f32 %v885, 0.0
  %v887 = vadd.f32 %v886, 1e-05
  %v888 = vrsqrt.pop %v887
  %v889 = vmul.f32 %v888, %v24
  %v890 = vmul.f32 %v882, %v889
  %v891 = vsub.f32 %v25, %v890
  %893 = vset.pattern.permute.xlu0 0
  %894 = vperm.xlu0 %893, %v889
  %v895 = vpop.permute.xlu0 %894
  %v897 = vmul.f32 %v710, %v895
  %v898 = vmul.f32 %v712, %v895
  %v899 = vmul.f32 %v781, %v895
  %v900 = vmul.f32 %v783, %v895
  %v901 = vmul.f32 %v852, %v895
  %v902 = vmul.f32 %v854, %v895
  %904 = vset.pattern.permute.xlu0 0
  %905 = vperm.xlu0 %904, %v891
  %v906 = vpop.permute.xlu0 %905
  %v908 = vadd.f32 %v897, %v906
  %v909 = vadd.f32 %v898, %v906
  %v910 = vadd.f32 %v899, %v906
  %v911 = vadd.f32 %v900, %v906
  %v912 = vadd.f32 %v901, %v906
  %v913 = vadd.f32 %v902, %v906
  %v914 = vmax.f32 %v908, 0.0
  %v915 = vmax.f32 %v909, 0.0
  %v916 = vmax.f32 %v910, 0.0
  %v917 = vmax.f32 %v911, 0.0
  %v918 = vmax.f32 %v912, 0.0
  %v919 = vmax.f32 %v913, 0.0
  %v920 = vadd.f32 %v914, %v17
  %v921 = vadd.f32 %v915, %v18
  %v922 = vadd.f32 %v916, %v19
  %v923 = vadd.f32 %v917, %v20
  %v924 = vadd.f32 %v918, %v21
  %v925 = vadd.f32 %v919, %v22
  %926 = vst [vmem:[%s4] sm:$0xff] %v920
  %927 = vst [vmem:[%s4 + $0x8] sm:$0xff] %v921
  %928 = vst [vmem:[%s4 + $0x10] sm:$0xff] %v922
  %929 = vst [vmem:[%s4 + $0x18] sm:$0xff] %v923
  %930 = vst [vmem:[%s4 + $0x20] sm:$0xff] %v924
  %931 = vst [vmem:[%s4 + $0x28] sm:$0xff] %v925
  // Predicated region
  $region18: #{resblock_forward.1} parent=0 // pred_check
    _
  $region19: #{resblock_forward.1} parent=0 // pred_check_branch
    %933 = sbr.rel (0) target = $region21
  $region20: #{resblock_forward.1} parent=0 // pred_region
    _
  $region21: #{resblock_forward.1} parent=0 // pred_fallthru
    _
  // Predicated region
  $region22: #{resblock_forward.1} parent=0 // pred_check
    _
  $region23: #{resblock_forward.1} parent=0 // pred_check_branch
    %935 = sbr.rel (0) target = $region25
  $region24: #{resblock_forward.1} parent=0 // pred_region
    _
  $region25: #{resblock_forward.1} parent=0 // pred_fallthru
    _

</llo_original>
